<compile_context>
chip_gen: v7x
topology: tpu7x:2x2x1
jax: 0.10.0
libtpu: 0.0.40
codegen_flags: <defaults>
</compile_context>

<pallas_src>
import functools

import jax
import jax.numpy as jnp
from jax import lax
from jax.experimental import pallas as pl
from jax.experimental.pallas import tpu as pltpu


def autopad(k, p=None, d=1):
    """Same-padding helper, matching the PyTorch module's autopad."""
    if d > 1:
        k = d * (k - 1) + 1
    if p is None:
        p = k // 2
    return p


def _round_up(v, m):
    return ((v + m - 1) // m) * m


# ---------------------------------------------------------------------------
# Kernels
# ---------------------------------------------------------------------------
def _epilogue(y_f32, shift_ref, apply_relu, o_ref):
    # Folded-BN bias (f32), broadcast over rows; ReLU; cast to bf16 store.
    y = y_f32 + shift_ref[...]
    if apply_relu:
        y = jnp.maximum(y, 0.0)
    o_ref[...] = y.astype(o_ref.dtype)


def _matmul_bn_relu_kernel(x_ref, w_ref, shift_ref, o_ref, *, apply_relu):
    # Full-K block per step: no accumulator needed.
    y = jnp.dot(x_ref[...], w_ref[...], preferred_element_type=jnp.float32)
    _epilogue(y, shift_ref, apply_relu, o_ref)


def _matmul_bn_relu_ksplit_kernel(x_ref, w_ref, shift_ref, o_ref, acc_ref, *,
                                  apply_relu):
    # K is tiled (innermost, "arbitrary" grid axis); accumulate in f32 VMEM.
    k = pl.program_id(2)

    @pl.when(k == 0)
    def _():
        acc_ref[...] = jnp.zeros_like(acc_ref)

    acc_ref[...] += jnp.dot(x_ref[...], w_ref[...],
                            preferred_element_type=jnp.float32)

    @pl.when(k == pl.num_programs(2) - 1)
    def _():
        _epilogue(acc_ref[...], shift_ref, apply_relu, o_ref)


# ---------------------------------------------------------------------------
# Host-side glue
# ---------------------------------------------------------------------------
def _prepare_inputs(x, weight, gamma, beta, running_mean, running_var, *,
                    stride, padding, dilation, eps, compute_dtype):
    """XLA-side glue: NHWC-ordered (bf16) patch extraction + BN folding."""
    n, c1, h, w = x.shape
    c2, c1_w, kh, kw = weight.shape
    assert c1 == c1_w
    kdim = c1 * kh * kw

    # Cast before patch extraction: the patches tensor (the biggest buffer in
    # the pipeline) is written in bf16 instead of f32.  Exact: the patch op is
    # a 0/1-kernel conv.
    xc = x.astype(compute_dtype)

    if kh == 1 and kw == 1 and padding == 0 and dilation == 1:
        # Fast path: 1x1 conv needs no patch extraction (subsample + layout).
        xs = xc[:, :, ::stride, ::stride] if stride > 1 else xc
        _, _, ho, wo = xs.shape
        x2d = xs.transpose(0, 2, 3, 1).reshape(n * ho * wo, c1)
    else:
        # NHWC output spec -> patches land as (N, Ho, Wo, C1*kh*kw); the feature
        # ordering is channel-major (C1, kh, kw) (grouped-conv construction,
        # layout independent), matching weight.reshape(c2, c1*kh*kw).
        patches = lax.conv_general_dilated_patches(
            xc, (kh, kw), (stride, stride),
            [(padding, padding), (padding, padding)],
            rhs_dilation=(dilation, dilation),
            dimension_numbers=("NCHW", "OIHW", "NHWC"))
        assert patches.shape[-1] == kdim
        _, ho, wo, _ = patches.shape
        x2d = patches.reshape(n * ho * wo, kdim)
        # TODO(synk): fuse the patch extraction into the kernel (grid over the
        # kh*kw taps, accumulate in VMEM) to remove the im2col materialization
        # entirely.

    # Fold BN (inference / running-stats form) into the conv weights:
    #   scale = gamma / sqrt(var + eps)   -> multiplied into weight columns
    #   shift = beta - mean * scale       -> single per-channel bias in-kernel
    scale = gamma.astype(jnp.float32) * lax.rsqrt(
        running_var.astype(jnp.float32) + eps)                          # (C2,)
    shift = beta.astype(jnp.float32) - running_mean.astype(jnp.float32) * scale
    w2d = weight.reshape(c2, kdim).T.astype(jnp.float32) * scale[None, :]

    return (x2d.astype(compute_dtype), w2d.astype(compute_dtype),
            shift.reshape(1, c2), (n, ho, wo, c2))


def _vmem_capacity_bytes():
    try:
        cap = getattr(pltpu.get_tpu_info(), "vmem_capacity_bytes", None)
        if cap:
            return int(cap)
    except Exception:
        pass
    return 64 * 1024 * 1024   # conservative default (v7x per-TensorCore VMEM)


def _select_tiles(m16, kdim, c2_pad, budget, in_isz, out_isz, tile_m_max=512):
    """Pick (tile_m, tile_n, tile_k) against a double-buffered VMEM budget."""
    def fits(tm, tn, tk):
        need_acc = tk < kdim
        use = (2 * tm * tk * in_isz          # x blocks (double-buffered)
               + 2 * tk * tn * in_isz        # weight blocks
               + 2 * c2_pad * 4              # BN shift
               + 2 * tm * tn * out_isz       # output blocks (bf16)
               + (tm * tn * 4 if need_acc else 0))   # f32 accumulator
        return use <= budget

    tm_max = min(tile_m_max, m16)
    tm_cands = list(dict.fromkeys(
        t for t in (tm_max, 512, 256, 128, 64, 32, 16) if t <= tm_max))
    tk_splits = [t for t in (2048, 1024, 512) if kdim > t and kdim % t == 0]

    # 1) Weight + shift fully resident (block index constant -> one DMA).
    for tm in tm_cands:
        if fits(tm, c2_pad, kdim):
            return tm, c2_pad, kdim
    # 2) Keep C2 un-tiled, split K (bounded VMEM; keeps tile_m large) -- v7x.
    for tm in tm_cands:
        for tk in tk_splits:
            if fits(tm, c2_pad, tk):
                return tm, c2_pad, tk
    # 3) Tile C2 as well.
    tn_cands = [t for t in (256, 128) if c2_pad > t and c2_pad % t == 0]
    for tn in tn_cands:
        for tm in tm_cands:
            for tk in [kdim] + tk_splits:
                if fits(tm, tn, tk):
                    return tm, tn, tk
    # Last resort.
    return 16, min(128, c2_pad), kdim


def conv_module_forward(x, weight, gamma, beta, running_mean, running_var, *,
                        stride=1, padding=None, groups=1, dilation=1,
                        eps=1e-5, act=True, tile_m=512,
                        compute_dtype=jnp.bfloat16, out_dtype=None,
                        nchw_output=True):
    """Pallas implementation of Conv.forward (BN in inference mode)."""
    assert groups == 1  # TODO(synk): grouped convolution (g>1) not implemented.
    c2, _, kh, kw = weight.shape
    assert kh == kw
    if padding is None:
        padding = autopad(kh, None, dilation)
    if out_dtype is None:
        out_dtype = x.dtype

    x2d, w2d, shift, (n, ho, wo, _) = _prepare_inputs(
        x, weight, gamma, beta, running_mean, running_var,
        stride=stride, padding=padding, dilation=dilation, eps=eps,
        compute_dtype=compute_dtype)
    m, kdim = x2d.shape

    # Lane-dense output: pad C2 up to a multiple of 128 so stores are unmasked.
    c2_pad = _round_up(c2, 128)
    if c2_pad != c2:
        w2d = jnp.pad(w2d, ((0, 0), (0, c2_pad - c2)))
        shift = jnp.pad(shift, ((0, 0), (0, c2_pad - c2)))

    in_isz = jnp.dtype(compute_dtype).itemsize
    out_isz = jnp.dtype(compute_dtype).itemsize    # kernel stores compute_dtype

    vmem_cap = _vmem_capacity_bytes()
    vmem_limit = min(int(vmem_cap * 0.75), 112 * 1024 * 1024)
    budget = vmem_limit - 2 * 1024 * 1024

    m16 = _round_up(m, 16)                         # bf16 packs 2 rows / sublane
    tile_m_sel, tile_n, tile_k = _select_tiles(
        m16, kdim, c2_pad, budget, in_isz, out_isz, tile_m_max=tile_m)

    # Megacore (v7x has 2 TensorCores): make sure the parallel grid has >= 2
    # tiles for small layers.
    if (pl.cdiv(m16, tile_m_sel) * (c2_pad // tile_n) == 1
            and tile_m_sel >= 32):
        tile_m_sel = max(16, _round_up(tile_m_sel // 2, 16))

    m_pad = pl.cdiv(m16, tile_m_sel) * tile_m_sel
    if m_pad != m:
        # Only hit when N*Ho*Wo is not already a tile multiple.
        # TODO(synk): handle the ragged last M tile in-grid instead of jnp.pad.
        x2d = jnp.pad(x2d, ((0, m_pad - m), (0, 0)))

    m_tiles = m_pad // tile_m_sel
    n_tiles = c2_pad // tile_n
    k_tiles = kdim // tile_k

    if k_tiles == 1:
        kernel = functools.partial(_matmul_bn_relu_kernel, apply_relu=bool(act))
        scratch_shapes = []
    else:
        kernel = functools.partial(_matmul_bn_relu_ksplit_kernel,
                                   apply_relu=bool(act))
        scratch_shapes = [pltpu.VMEM((tile_m_sel, tile_n), jnp.float32)]

    w_reads = 1 if (n_tiles == 1 and k_tiles == 1) else m_tiles
    cost = pl.CostEstimate(
        flops=2 * m_pad * kdim * c2_pad,
        transcendentals=0,
        bytes_accessed=(m_pad * kdim * in_isz * n_tiles
                        + kdim * c2_pad * in_isz * w_reads
                        + c2_pad * 4
                        + m_pad * c2_pad * out_isz))

    out2d = pl.pallas_call(
        kernel,
        out_shape=jax.ShapeDtypeStruct((m_pad, c2_pad), compute_dtype),
        grid_spec=pltpu.PrefetchScalarGridSpec(
            num_scalar_prefetch=0,
            grid=(m_tiles, n_tiles, k_tiles),
            in_specs=[
                pl.BlockSpec((tile_m_sel, tile_k), lambda i, j, k: (i, k)),
                # With the preferred tiling (tile_n == c2_pad, tile_k == kdim)
                # the weight and shift block indices are constant -> one DMA.
                pl.BlockSpec((tile_k, tile_n), lambda i, j, k: (k, j)),
                pl.BlockSpec((1, tile_n), lambda i, j, k: (0, j)),
            ],
            out_specs=pl.BlockSpec((tile_m_sel, tile_n), lambda i, j, k: (i, j)),
            scratch_shapes=scratch_shapes,
        ),
        compiler_params=pltpu.CompilerParams(
            dimension_semantics=("parallel", "parallel", "arbitrary"),
            vmem_limit_bytes=vmem_limit),
        cost_estimate=cost,
    )(x2d, w2d, shift)

    out_nhwc = out2d[:m, :c2].reshape(n, ho, wo, c2)
    if not nchw_output:
        return out_nhwc.astype(out_dtype)            # NHWC consumers skip the transpose
    return out_nhwc.transpose(0, 3, 1, 2).astype(out_dtype)   # NCHW (module semantics)


# ---------------------------------------------------------------------------
# References / tests
# ---------------------------------------------------------------------------
def _reference(x, weight, gamma, beta, mean, var, *, stride, padding,
               dilation, eps, act):
    y = lax.conv_general_dilated(
        x.astype(jnp.float32), weight.astype(jnp.float32),
        (stride, stride), [(padding, padding), (padding, padding)],
        rhs_dilation=(dilation, dilation),
        dimension_numbers=("NCHW", "OIHW", "NCHW"))
    b = lambda v: v.reshape(1, -1, 1, 1).astype(jnp.float32)
    y = (y - b(mean)) * b(lax.rsqrt(var.astype(jnp.float32) + eps)) * b(gamma) + b(beta)
    if act:
        y = jnp.maximum(y, 0.0)
    return y


def _run_case(key, *, N, C1, H, W, C2, K, S, eps=1e-5, act=True):
    k_w, k_g, k_b, k_m, k_v, k_x = jax.random.split(key, 6)
    weight = 0.1 * jax.random.normal(k_w, (C2, C1, K, K), dtype=jnp.float32)
    gamma = 1.0 + 0.1 * jax.random.normal(k_g, (C2,), dtype=jnp.float32)
    beta = 0.05 * jax.random.normal(k_b, (C2,), dtype=jnp.float32)
    running_mean = 0.1 * jax.random.normal(k_m, (C2,), dtype=jnp.float32)
    running_var = 1.0 + 0.2 * jax.random.uniform(k_v, (C2,), dtype=jnp.float32)
    x = jax.random.normal(k_x, (N, C1, H, W), dtype=jnp.float32)

    pad = autopad(K)
    out = conv_module_forward(
        x, weight, gamma, beta, running_mean, running_var,
        stride=S, padding=pad, groups=1, dilation=1, eps=eps, act=act)
    out = jax.block_until_ready(out)

    # Tight check: same bf16-quantized operands and same bf16 output rounding.
    x2d, w2d, shift, (n, ho, wo, c2) = _prepare_inputs(
        x, weight, gamma, beta, running_mean, running_var,
        stride=S, padding=pad, dilation=1, eps=eps,
        compute_dtype=jnp.bfloat16)
    ref2d = jnp.dot(x2d.astype(jnp.float32), w2d.astype(jnp.float32),
                    precision=lax.Precision.HIGHEST) + shift
    if act:
        ref2d = jnp.maximum(ref2d, 0.0)
    ref_tight = (ref2d.astype(jnp.bfloat16).astype(jnp.float32)
                 .reshape(n, ho, wo, c2).transpose(0, 3, 1, 2))

    # Loose check: full f32 conv+BN+ReLU reference (bf16 tolerance).
    ref_f32 = _reference(x, weight, gamma, beta, running_mean, running_var,
                         stride=S, padding=pad, dilation=1, eps=eps, act=act)

    assert out.shape == ref_f32.shape, (out.shape, ref_f32.shape)
    assert jnp.allclose(out, ref_tight, atol=2e-2, rtol=2e-2), float(
        jnp.max(jnp.abs(out - ref_tight)))
    assert jnp.allclose(out, ref_f32, atol=5e-2, rtol=5e-2), float(
        jnp.max(jnp.abs(out - ref_f32)))


if __name__ == "__main__":
    key = jax.random.PRNGKey(0)
    k1, k2, k3 = jax.random.split(key, 3)

    # Conv(c1=4, c2=8, k=3, s=1) -> autopad p=1
    _run_case(k1, N=2, C1=4, H=16, W=16, C2=8, K=3, S=1)
    # Conv(c1=4, c2=16, k=1, s=1) -> autopad p=0 (1x1 fast path)
    _run_case(k2, N=2, C1=4, H=16, W=16, C2=16, K=1, S=1)
    # Conv(c1=4, c2=8, k=3, s=2) -> strided conv
    _run_case(k3, N=2, C1=4, H=16, W=16, C2=8, K=3, S=2)

    print("KERNEL_OK")
</pallas_src>

<mosaic_0001>
module attributes {stable_mosaic.version = 11 : i64} {
  func.func @_matmul_bn_relu_kernel(%arg0: i32, %arg1: i32, %arg2: i32, %arg3: memref<256x36xbf16, #tpu.memory_space<vmem>>, %arg4: memref<36x128xbf16, #tpu.memory_space<vmem>>, %arg5: memref<1x128xf32, #tpu.memory_space<vmem>>, %arg6: memref<256x128xbf16, #tpu.memory_space<vmem>>) attributes {dimension_semantics = [#tpu.dimension_semantics<parallel>, #tpu.dimension_semantics<parallel>, #tpu.dimension_semantics<arbitrary>], iteration_bounds = array<i64: 2, 1, 1>, scalar_prefetch = 0 : i64, scratch_operands = 0 : i64, tpu.core_type = #tpu.core_type<tc>, window_params = [{transform_indices = @transform_0, window_bounds = array<i64: 256, 36>}, {transform_indices = @transform_1, window_bounds = array<i64: 36, 128>}, {transform_indices = @transform_2, window_bounds = array<i64: 1, 128>}, {transform_indices = @transform_3, window_bounds = array<i64: 256, 128>}]} {
    %c0 = arith.constant 0 : index
    %c0_0 = arith.constant 0 : index
    %0 = vector.load %arg3[%c0, %c0_0] : memref<256x36xbf16, #tpu.memory_space<vmem>>, vector<256x36xbf16>
    %c0_1 = arith.constant 0 : index
    %c0_2 = arith.constant 0 : index
    %1 = vector.load %arg4[%c0_1, %c0_2] : memref<36x128xbf16, #tpu.memory_space<vmem>>, vector<36x128xbf16>
    %cst = arith.constant dense<0.000000e+00> : vector<256x128xf32>
    %2 = tpu.matmul %0, %1, %cst {dimension_numbers = #tpu.dot_dimension_numbers<[1], [0], [0], [1], [0, 0, 1, 1], [], []>} : vector<256x36xbf16>, vector<36x128xbf16>, vector<256x128xf32> -> vector<256x128xf32>
    %c0_3 = arith.constant 0 : index
    %c0_4 = arith.constant 0 : index
    %3 = vector.load %arg5[%c0_3, %c0_4] : memref<1x128xf32, #tpu.memory_space<vmem>>, vector<1x128xf32>
    %4 = vector.broadcast %3 : vector<1x128xf32> to vector<256x128xf32>
    %5 = arith.addf %2, %4 : vector<256x128xf32>
    %cst_5 = arith.constant 0.000000e+00 : f32
    %6 = vector.broadcast %cst_5 : f32 to vector<256x128xf32>
    %7 = arith.maximumf %5, %6 : vector<256x128xf32>
    %8 = arith.truncf %7 : vector<256x128xf32> to vector<256x128xbf16>
    %c0_6 = arith.constant 0 : index
    %c0_7 = arith.constant 0 : index
    %9 = vector.load %arg6[%c0_6, %c0_7] : memref<256x128xbf16, #tpu.memory_space<vmem>>, vector<256x128xbf16>
    tpu.vector_store %arg6[%c0_6, %c0_7], %8 {strides = array<i32>} : memref<256x128xbf16, #tpu.memory_space<vmem>>, vector<256x128xbf16>,
    return
  }
  func.func @transform_0(%arg0: i32, %arg1: i32, %arg2: i32) -> (i32, i32) {
    %c0_i32 = arith.constant 0 : i32
    return %arg0, %arg2 : i32, i32
  }
  func.func @transform_1(%arg0: i32, %arg1: i32, %arg2: i32) -> (i32, i32) {
    %c0_i32 = arith.constant 0 : i32
    return %arg2, %arg1 : i32, i32
  }
  func.func @transform_2(%arg0: i32, %arg1: i32, %arg2: i32) -> (i32, i32) {
    %c0_i32 = arith.constant 0 : i32
    %c0_i32_0 = arith.constant 0 : i32
    return %c0_i32, %arg1 : i32, i32
  }
  func.func @transform_3(%arg0: i32, %arg1: i32, %arg2: i32) -> (i32, i32) {
    %c0_i32 = arith.constant 0 : i32
    return %arg0, %arg1 : i32, i32
  }
}

</mosaic_0001>

<llo_original>
// kernel: tpu_custom_call.1
$region0: #{tpu_custom_call.1}
  #allocation0 [shape = 'u32[]', space=smem, size = 0x4, offset = 0x4, fixed_abs, tag = 'smem constant byte address 0x4 - core index']
  #allocation1 [shape = 'u32[144,128]{1,0:T(1,128)}', space=vmem, size = 0x12000, scoped, tag = 'internal scratch']
  %s0 = inlined_call_operand.vmem [shape: bf16[512,36], index: 0, kind: input, shape index: {}]
  %s1 = inlined_call_operand.vmem [shape: bf16[36,128], index: 1, kind: input, shape index: {}]
  %s2 = inlined_call_operand.vmem [shape: f32[1,128], index: 2, kind: input, shape index: {}]
  %s3 = inlined_call_operand.hbm [shape: bf16[512,128], index: 3, kind: output, shape index: {}]
  %s4 = sld [smem:[#allocation0]]
  $region45: #{tpu_custom_call.1} parent=0
    _
  %s6 = ssub.s32 1, %s4
  %s7 = scalar_select 0, %s6, %s4
  $region1: #{tpu_custom_call.1} parent=0
    #allocation2 [shape = 'u8[131072]{0}', space=vmem, size = 0x20000, scoped, tag = 'output window, operand 0']
    #allocation3 [shape = 's32[2]{0}', space=sflag, size = 0x8, scoped, tag = 'scoped memory for tpu_custom_call.1']
    %8 = vsyncpa [#allocation3], 0
    %s9 = scalar_lea.sflag [#allocation3], 1
    %10 = vsyncpa %s9, 0
    loop: start=0, step=1, limit=4
    $region2: #{tpu_custom_call.1} parent=1 // loop_pre_header
      _
    $region3: #{tpu_custom_call.1} parent=1 // loop_header
      %s12 = sphi 0, %s16
      %p13 = scmp.ge.s32.totalorder %s12, 4
      %s19 = sphi 0, %s38
      %s20 = sphi 0, %s34
      %s21 = sphi 0, %s30
      %s22 = sphi 0, %s19
      %s23 = sphi 0, %s20
      %s24 = sphi 0, %s21
      %s25 = sphi 0, %s22
      %s26 = sphi 0, %s23
      %s27 = sphi 0, %s24
      %s43 = sphi 0, %s45
      %s46 = sphi 0, %s43
      %s47 = sphi 0, %s46
      %s63 = sphi 0, %s47
      %s71 = sphi 0, %s73
      %s74 = sphi 0, %s71
      %s75 = sphi 0, %s74
      %s91 = sphi 0, %s75
      %s97 = sphi 0, %s99
      %s100 = sphi 0, %s97
      %s101 = sphi 0, %s100
      %s117 = sphi 0, %s101
      %s125 = sphi 0, %s127
      %s128 = sphi 0, %s125
      %s129 = sphi 0, %s128
      %s145 = sphi 0, %s129
    $region4: #{tpu_custom_call.1} parent=1 // loop_header_branch
      %15 = sbr.rel (%p13) target = $region8
    $region5: #{tpu_custom_call.1} parent=1 // loop_body
      %s17 = ssub.s32 %s12, 1
      %s18 = ssub.s32 %s12, 2
      %s28 = sadd.s32 1, %s21
      %p29 = scmp.ge.s32.totalorder %s28, 1
      %s30 = scalar_select %p29, 0, %s28
      %s31 = sadd.s32 1, %s20
      %s32 = scalar_select %p29, %s31, %s20
      %p33 = scmp.ge.s32.totalorder %s32, 1
      %s34 = scalar_select %p33, 0, %s32
      %s35 = sadd.s32 1, %s19
      %s36 = scalar_select %p33, %s35, %s19
      %p37 = scmp.ge.s32.totalorder %s36, 2
      %s38 = scalar_select %p37, 0, %s36
      %s39 = ssub.s32 %s19, %s38
      %s40 = ssub.s32 %s21, %s30
      %s41 = sor.u32 %s39, %s40
      %p42 = scmp.eq.s32.totalorder %s41, 0
      %s44 = sadd.s32 %s43, 1
      %s45 = scalar_select %p42, %s43, %s44
      %p48 = pneg %p42
      %p49 = scmp.eq.s32.totalorder %s12, 1
      %p50 = por %p48, %p49
      %p51 = scmp.ne.s32.totalorder %s43, %s46
      %p52 = scmp.eq.s32.totalorder %s12, 0
      %p53 = por %p51, %p52
      %p54 = scmp.ne.s32.totalorder %s43, %s46
      %p55 = scmp.eq.s32.totalorder %s17, 1
      %p56 = por %p54, %p55
      %p57 = scmp.ne.s32.totalorder %s46, %s47
      %p58 = scmp.eq.s32.totalorder %s17, 0
      %p59 = por %p57, %p58
      %p60 = scmp.ne.s32.totalorder %s46, %s47
      %p61 = scmp.eq.s32.totalorder %s18, 1
      %p62 = por %p60, %p61
      %p64 = scmp.ne.s32.totalorder %s47, %s63
      %p65 = scmp.eq.s32.totalorder %s18, 0
      %p66 = por %p64, %p65
      %s67 = ssub.s32 %s21, %s30
      %s68 = ssub.s32 %s20, %s34
      %s69 = sor.u32 %s67, %s68
      %p70 = scmp.eq.s32.totalorder %s69, 0
      %s72 = sadd.s32 %s71, 1
      %s73 = scalar_select %p70, %s71, %s72
      %p76 = pneg %p70
      %p77 = scmp.eq.s32.totalorder %s12, 1
      %p78 = por %p76, %p77
      %p79 = scmp.ne.s32.totalorder %s71, %s74
      %p80 = scmp.eq.s32.totalorder %s12, 0
      %p81 = por %p79, %p80
      %p82 = scmp.ne.s32.totalorder %s71, %s74
      %p83 = scmp.eq.s32.totalorder %s17, 1
      %p84 = por %p82, %p83
      %p85 = scmp.ne.s32.totalorder %s74, %s75
      %p86 = scmp.eq.s32.totalorder %s17, 0
      %p87 = por %p85, %p86
      %p88 = scmp.ne.s32.totalorder %s74, %s75
      %p89 = scmp.eq.s32.totalorder %s18, 1
      %p90 = por %p88, %p89
      %p92 = scmp.ne.s32.totalorder %s75, %s91
      %p93 = scmp.eq.s32.totalorder %s18, 0
      %p94 = por %p92, %p93
      %s95 = ssub.s32 %s20, %s34
      %p96 = scmp.eq.s32.totalorder %s95, 0
      %s98 = sadd.s32 %s97, 1
      %s99 = scalar_select %p96, %s97, %s98
      %p102 = pneg %p96
      %p103 = scmp.eq.s32.totalorder %s12, 1
      %p104 = por %p102, %p103
      %p105 = scmp.ne.s32.totalorder %s97, %s100
      %p106 = scmp.eq.s32.totalorder %s12, 0
      %p107 = por %p105, %p106
      %p108 = scmp.ne.s32.totalorder %s97, %s100
      %p109 = scmp.eq.s32.totalorder %s17, 1
      %p110 = por %p108, %p109
      %p111 = scmp.ne.s32.totalorder %s100, %s101
      %p112 = scmp.eq.s32.totalorder %s17, 0
      %p113 = por %p111, %p112
      %p114 = scmp.ne.s32.totalorder %s100, %s101
      %p115 = scmp.eq.s32.totalorder %s18, 1
      %p116 = por %p114, %p115
      %p118 = scmp.ne.s32.totalorder %s101, %s117
      %p119 = scmp.eq.s32.totalorder %s18, 0
      %p120 = por %p118, %p119
      %s121 = ssub.s32 %s19, %s38
      %s122 = ssub.s32 %s20, %s34
      %s123 = sor.u32 %s121, %s122
      %p124 = scmp.eq.s32.totalorder %s123, 0
      %s126 = sadd.s32 %s125, 1
      %s127 = scalar_select %p124, %s125, %s126
      %p130 = pneg %p124
      %p131 = scmp.eq.s32.totalorder %s12, 1
      %p132 = por %p130, %p131
      %p133 = scmp.ne.s32.totalorder %s125, %s128
      %p134 = scmp.eq.s32.totalorder %s12, 0
      %p135 = por %p133, %p134
      %p136 = scmp.ne.s32.totalorder %s125, %s128
      %p137 = scmp.eq.s32.totalorder %s17, 1
      %p138 = por %p136, %p137
      %p139 = scmp.ne.s32.totalorder %s128, %s129
      %p140 = scmp.eq.s32.totalorder %s17, 0
      %p141 = por %p139, %p140
      %p142 = scmp.ne.s32.totalorder %s128, %s129
      %p143 = scmp.eq.s32.totalorder %s18, 1
      %p144 = por %p142, %p143
      %p146 = scmp.ne.s32.totalorder %s129, %s145
      %p147 = scmp.eq.s32.totalorder %s18, 0
      %p148 = por %p146, %p147
      %p149 = scmp.le.s32.totalorder 1, %s12
      %p150 = scmp.lt.s32.totalorder %s12, 3
      %p151 = pnand %p149, %p150
      %p152 = pneg %p151
      // Predicated region
      $region9: #{tpu_custom_call.1} parent=5 // pred_check
        _
      $region10: #{tpu_custom_call.1} parent=5 // pred_check_branch
        %154 = sbr.rel (%p151) target = $region12
      $region11: #{tpu_custom_call.1} parent=5 // pred_region
        %s155 = ssub.s32 %s12, 1
        // Predicated region
        $region13: #{tpu_custom_call.1} parent=11 // pred_check
          %p156 = pneg %p87
        $region14: #{tpu_custom_call.1} parent=11 // pred_check_branch
          %158 = sbr.rel (%p156) target = $region16
        $region15: #{tpu_custom_call.1} parent=11 // pred_region
          %s159 = smul.u32 5, %s24
          %p160 = scmp.lt.s32.totalorder %s159, 4
          %s161 = scalar_select %p160, %s159, 4
          %p162 = scmp.lt.s32.totalorder %s23, 0
          %s163 = scalar_select %p162, %s23, 0
          %s164 = sadd.s32 %s163, %s161
          %s165 = smul.addr %s164, 4
          %s166 = scalar_lea.vmem %s1, %s165
          %s167 = smul.u32 5, %s24
        $region16: #{tpu_custom_call.1} parent=11 // pred_fallthru
          _
        // Predicated region
        $region17: #{tpu_custom_call.1} parent=11 // pred_check
          %p168 = pneg %p113
        $region18: #{tpu_custom_call.1} parent=11 // pred_check_branch
          %170 = sbr.rel (%p168) target = $region20
        $region19: #{tpu_custom_call.1} parent=11 // pred_region
          %p171 = scmp.lt.s32.totalorder %s23, 0
          %s172 = scalar_select %p171, %s23, 0
          %s173 = scalar_lea.vmem %s2, %s172
        $region20: #{tpu_custom_call.1} parent=11 // pred_fallthru
          _
      $region12: #{tpu_custom_call.1} parent=5 // pred_fallthru
        _
      %p174 = scmp.lt.s32.totalorder %s12, 2
      // Predicated region
      $region21: #{tpu_custom_call.1} parent=5 // pred_check
        %p175 = pneg %p174
      $region22: #{tpu_custom_call.1} parent=5 // pred_check_branch
        %177 = sbr.rel (%p175) target = $region24
      $region23: #{tpu_custom_call.1} parent=5 // pred_region
        // Predicated region
        $region25: #{tpu_custom_call.1} parent=23 // pred_check
          %p178 = pneg %p53
        $region26: #{tpu_custom_call.1} parent=23 // pred_check_branch
          %180 = sbr.rel (%p178) target = $region28
        $region27: #{tpu_custom_call.1} parent=23 // pred_region
          %s181 = smul.u32 32, %s19
          %p182 = scmp.lt.s32.totalorder %s181, 63
          %s183 = scalar_select %p182, %s181, 63
          %p184 = scmp.lt.s32.totalorder %s21, 0
          %s185 = scalar_select %p184, %s21, 0
          %s186 = sadd.s32 %s185, %s183
          %s187 = smul.addr %s186, 4
          %s188 = scalar_lea.vmem %s0, %s187
          %s189 = smul.u32 32, %s19
        $region28: #{tpu_custom_call.1} parent=23 // pred_fallthru
          _
      $region24: #{tpu_custom_call.1} parent=5 // pred_fallthru
        _
      %p190 = scmp.le.s32.totalorder 1, %s12
      %p191 = scmp.lt.s32.totalorder %s12, 3
      %p192 = pnand %p190, %p191
      %p193 = pneg %p192
      // Predicated region
      $region29: #{tpu_custom_call.1} parent=5 // pred_check
        _
      $region30: #{tpu_custom_call.1} parent=5 // pred_check_branch
        %195 = sbr.rel (%p192) target = $region32
      $region31: #{tpu_custom_call.1} parent=5 // pred_region
        %s196 = ssub.s32 %s12, 1
        %s197 = smul.u32 32, %s22
        %p198 = scmp.lt.s32.totalorder %s197, 63
        %s199 = scalar_select %p198, %s197, 63
        %p200 = scmp.lt.s32.totalorder %s24, 0
        %s201 = scalar_select %p200, %s24, 0
        %s202 = sadd.s32 %s201, %s199
        %s203 = smul.addr %s202, 4
        %s204 = scalar_lea.vmem %s0, %s203
        %p205 = pneg %p59
        %p206 = pneg %p56
        %s207 = smul.u32 5, %s24
        %p208 = scmp.lt.s32.totalorder %s207, 4
        %s209 = scalar_select %p208, %s207, 4
        %p210 = scmp.lt.s32.totalorder %s23, 0
        %s211 = scalar_select %p210, %s23, 0
        %s212 = sadd.s32 %s211, %s209
        %s213 = smul.addr %s212, 4
        %s214 = scalar_lea.vmem %s1, %s213
        %p215 = pneg %p87
        %p216 = pneg %p84
        %p217 = scmp.lt.s32.totalorder %s23, 0
        %s218 = scalar_select %p217, %s23, 0
        %s219 = scalar_lea.vmem %s2, %s218
        %p220 = pneg %p113
        %p221 = pneg %p110
        %p222 = pneg %p141
        %p223 = pneg %p138
        %s224 = sand.u32 %s128, 1
        %s225 = scalar_lea.sflag [#allocation3], %s224
        %s226 = sand.u32 %s128, 1
        %s227 = smul.addr %s226, 128
        %s228 = scalar_lea.vmem [#allocation2], %s227
        %s229 = smul.u32 32, %s22
        %p230 = scmp.lt.s32.totalorder %s229, 63
        %s231 = scalar_select %p230, %s229, 63
        %p232 = scmp.lt.s32.totalorder %s24, 0
        %s233 = scalar_select %p232, %s24, 0
        %s234 = sadd.s32 %s233, %s231
        %s235 = smul.addr %s234, 4
        %s236 = scalar_lea.vmem %s0, %s235
        %s237 = smul.u32 32, %s22
        %s238 = smul.u32 5, %s24
        %p239 = scmp.lt.s32.totalorder %s238, 4
        %s240 = scalar_select %p239, %s238, 4
        %p241 = scmp.lt.s32.totalorder %s23, 0
        %s242 = scalar_select %p241, %s23, 0
        %s243 = sadd.s32 %s242, %s240
        %s244 = smul.addr %s243, 4
        %s245 = scalar_lea.vmem %s1, %s244
        %s246 = smul.u32 5, %s24
        %p247 = scmp.lt.s32.totalorder %s23, 0
        %s248 = scalar_select %p247, %s23, 0
        %s249 = scalar_lea.vmem %s2, %s248
        %s250 = smul.u32 32, %s22
        %v252 = vld [vmem:[%s236] sm:$0xf]
        %v253 = vld [vmem:[%s236 + $0x4] sm:$0xf]
        %v254 = vld [vmem:[%s236 + $0x8] sm:$0xf]
        %v255 = vld [vmem:[%s236 + $0xc] sm:$0xf]
        %v256 = vld [vmem:[%s236 + $0x10] sm:$0xf]
        %v257 = vld [vmem:[%s236 + $0x14] sm:$0xf]
        %v258 = vld [vmem:[%s236 + $0x18] sm:$0xf]
        %v259 = vld [vmem:[%s236 + $0x1c] sm:$0xf]
        %v260 = vld [vmem:[%s236 + $0x20] sm:$0xf]
        %v261 = vld [vmem:[%s236 + $0x24] sm:$0xf]
        %v262 = vld [vmem:[%s236 + $0x28] sm:$0xf]
        %v263 = vld [vmem:[%s236 + $0x2c] sm:$0xf]
        %v264 = vld [vmem:[%s236 + $0x30] sm:$0xf]
        %v265 = vld [vmem:[%s236 + $0x34] sm:$0xf]
        %v266 = vld [vmem:[%s236 + $0x38] sm:$0xf]
        %v267 = vld [vmem:[%s236 + $0x3c] sm:$0xf]
        %v268 = vld [vmem:[%s236 + $0x40] sm:$0xf]
        %v269 = vld [vmem:[%s236 + $0x44] sm:$0xf]
        %v270 = vld [vmem:[%s236 + $0x48] sm:$0xf]
        %v271 = vld [vmem:[%s236 + $0x4c] sm:$0xf]
        %v272 = vld [vmem:[%s236 + $0x50] sm:$0xf]
        %v273 = vld [vmem:[%s236 + $0x54] sm:$0xf]
        %v274 = vld [vmem:[%s236 + $0x58] sm:$0xf]
        %v275 = vld [vmem:[%s236 + $0x5c] sm:$0xf]
        %v276 = vld [vmem:[%s236 + $0x60] sm:$0xf]
        %v277 = vld [vmem:[%s236 + $0x64] sm:$0xf]
        %v278 = vld [vmem:[%s236 + $0x68] sm:$0xf]
        %v279 = vld [vmem:[%s236 + $0x6c] sm:$0xf]
        %v280 = vld [vmem:[%s236 + $0x70] sm:$0xf]
        %v281 = vld [vmem:[%s236 + $0x74] sm:$0xf]
        %v282 = vld [vmem:[%s236 + $0x78] sm:$0xf]
        %v283 = vld [vmem:[%s236 + $0x7c] sm:$0xf]
        %v284 = vld [vmem:[%s245] sm:$0xf]
        %v285 = vld [vmem:[%s245 + $0x4] sm:$0xf]
        %v286 = vld [vmem:[%s245 + $0x8] sm:$0xf]
        %v287 = vld [vmem:[%s245 + $0xc] sm:$0xf]
        %v288 = vld [vmem:[%s245 + $0x10] sm:$0x3]
        %v289 = vld [vmem:[%s249] sm:$0x1]
        %v291 = vlaneseq
        %v292 = vshrl.u32 %v291, 7
        %v293 = vsub.s32 0, %v292
        %v294 = vrot.slane %v289, %v293
        %v328 = vunpack.c.l.b16 %v252
        %v329 = vunpack.c.l.b16 %v253
        %v330 = vunpack.c.l.b16 %v254
        %v331 = vunpack.c.l.b16 %v255
        %v332 = vunpack.c.l.b16 %v256
        %v333 = vunpack.c.l.b16 %v257
        %v334 = vunpack.c.l.b16 %v258
        %v335 = vunpack.c.l.b16 %v259
        %v336 = vunpack.c.l.b16 %v260
        %v337 = vunpack.c.l.b16 %v261
        %v338 = vunpack.c.l.b16 %v262
        %v339 = vunpack.c.l.b16 %v263
        %v340 = vunpack.c.l.b16 %v264
        %v341 = vunpack.c.l.b16 %v265
        %v342 = vunpack.c.l.b16 %v266
        %v343 = vunpack.c.l.b16 %v267
        %v344 = vunpack.c.l.b16 %v268
        %v345 = vunpack.c.l.b16 %v269
        %v346 = vunpack.c.l.b16 %v270
        %v347 = vunpack.c.l.b16 %v271
        %v348 = vunpack.c.l.b16 %v272
        %v349 = vunpack.c.l.b16 %v273
        %v350 = vunpack.c.l.b16 %v274
        %v351 = vunpack.c.l.b16 %v275
        %v352 = vunpack.c.l.b16 %v276
        %v353 = vunpack.c.l.b16 %v277
        %v354 = vunpack.c.l.b16 %v278
        %v355 = vunpack.c.l.b16 %v279
        %v356 = vunpack.c.l.b16 %v280
        %v357 = vunpack.c.l.b16 %v281
        %v358 = vunpack.c.l.b16 %v282
        %v359 = vunpack.c.l.b16 %v283
        %v360 = vpack.c.b16 %v329, %v328
        %v361 = vpack.c.b16 %v331, %v330
        %v362 = vpack.c.b16 %v333, %v332
        %v363 = vpack.c.b16 %v335, %v334
        %v364 = vpack.c.b16 %v337, %v336
        %v365 = vpack.c.b16 %v339, %v338
        %v366 = vpack.c.b16 %v341, %v340
        %v367 = vpack.c.b16 %v343, %v342
        %v368 = vpack.c.b16 %v345, %v344
        %v369 = vpack.c.b16 %v347, %v346
        %v370 = vpack.c.b16 %v349, %v348
        %v371 = vpack.c.b16 %v351, %v350
        %v372 = vpack.c.b16 %v353, %v352
        %v373 = vpack.c.b16 %v355, %v354
        %v374 = vpack.c.b16 %v357, %v356
        %v375 = vpack.c.b16 %v359, %v358
        %v381 = vunpack.c.l.b16 %v284
        %v382 = vunpack.c.l.b16 %v285
        %v383 = vunpack.c.l.b16 %v286
        %v384 = vunpack.c.l.b16 %v287
        %v385 = vunpack.c.l.b16 %v288
        %v386 = vpack.c.b16 %v382, %v381
        %v387 = vpack.c.b16 %v384, %v383
        %v388 = vpack.c.b16 %v385, %v385
        %vm391 = vcmask 293888
        %v393 = vsel %vm391, %v360, 0
        %v396 = vsel %vm391, %v361, 0
        %v399 = vsel %vm391, %v362, 0
        %v402 = vsel %vm391, %v363, 0
        %v405 = vsel %vm391, %v364, 0
        %v408 = vsel %vm391, %v365, 0
        %v411 = vsel %vm391, %v366, 0
        %v414 = vsel %vm391, %v367, 0
        %v417 = vsel %vm391, %v368, 0
        %v420 = vsel %vm391, %v369, 0
        %v423 = vsel %vm391, %v370, 0
        %v426 = vsel %vm391, %v371, 0
        %v429 = vsel %vm391, %v372, 0
        %v432 = vsel %vm391, %v373, 0
        %v435 = vsel %vm391, %v374, 0
        %v438 = vsel %vm391, %v375, 0
        %vm440 = vcmask 1041408
        %v442 = vsel %vm440, %v388, 0
        %444 = vmatprep.subr.bf16.mxu0 0
        %445 = vmatpush1.bf16.msra.mxu0 %v386
        %446 = vmatprep.subr.bf16.mxu0 0
        %447 = vmatpush1.bf16.msra.mxu0 %v387
        %448 = vmatprep.subr.bf16.mxu0 0
        %449 = vmatpush1.bf16.msra.mxu0 %v442
        %450 = vmatprep.subr.bf16.mxu0 0
        %451 = vmatpush1.bf16.msra.mxu0 0
        %452 = vmatprep.subr.bf16.mxu0 0
        %453 = vmatpush1.bf16.msra.mxu0 0
        %454 = vmatprep.subr.bf16.mxu0 0
        %455 = vmatpush1.bf16.msra.mxu0 0
        %456 = vmatprep.subr.bf16.mxu0 0
        %457 = vmatpush1.bf16.msra.mxu0 0
        %458 = vmatprep.subr.bf16.mxu0 0
        %459 = vmatpush1.bf16.msra.mxu0 0
        %460 = vmatprep.subr.bf16.mxu0 0
        %461 = vmatpush1.bf16.msra.mxu0 0
        %462 = vmatprep.subr.bf16.mxu0 0
        %463 = vmatpush1.bf16.msra.mxu0 0
        %464 = vmatprep.subr.bf16.mxu0 0
        %465 = vmatpush1.bf16.msra.mxu0 0
        %466 = vmatprep.subr.bf16.mxu0 0
        %467 = vmatpush1.bf16.msra.mxu0 0
        %468 = vmatprep.subr.bf16.mxu0 0
        %469 = vmatpush1.bf16.msra.mxu0 0
        %470 = vmatprep.subr.bf16.mxu0 0
        %471 = vmatpush1.bf16.msra.mxu0 0
        %472 = vmatprep.subr.bf16.mxu0 0
        %473 = vmatpush1.bf16.msra.mxu0 0
        %474 = vmatprep.subr.bf16.mxu0 0
        %475 = vmatpush1.bf16.msra.mxu0 0
        %476 = vmatprep.mubr.bf16.mxu0 0
        %477 = vmatmul.mubr.bf16.gmra.mrb[0].mxu0 %v393
        %v478 = vpop.f32.mrb[0].mxu0
        %v479 = vadd.f32 %v294, %v478
        %v480 = vpop.f32.mrb[0].mxu0
        %v481 = vpop.f32.mrb[0].mxu0
        %v482 = vadd.f32 %v294, %v481
        %v483 = vpop.f32.mrb[0].mxu0
        %484 = vmatprep.mubr.bf16.mxu0 0
        %485 = vmatmul.mubr.bf16.gmra.mrb[0].mxu0 %v396
        %v486 = vpop.f32.mrb[0].mxu0
        %v487 = vadd.f32 %v294, %v486
        %v488 = vpop.f32.mrb[0].mxu0
        %v489 = vpop.f32.mrb[0].mxu0
        %v490 = vadd.f32 %v294, %v489
        %v491 = vpop.f32.mrb[0].mxu0
        %492 = vmatprep.mubr.bf16.mxu0 0
        %493 = vmatmul.mubr.bf16.gmra.mrb[0].mxu0 %v399
        %v494 = vpop.f32.mrb[0].mxu0
        %v495 = vadd.f32 %v294, %v494
        %v496 = vpop.f32.mrb[0].mxu0
        %v497 = vpop.f32.mrb[0].mxu0
        %v498 = vadd.f32 %v294, %v497
        %v499 = vpop.f32.mrb[0].mxu0
        %500 = vmatprep.mubr.bf16.mxu0 0
        %501 = vmatmul.mubr.bf16.gmra.mrb[0].mxu0 %v402
        %v502 = vpop.f32.mrb[0].mxu0
        %v503 = vadd.f32 %v294, %v502
        %v504 = vpop.f32.mrb[0].mxu0
        %v505 = vpop.f32.mrb[0].mxu0
        %v506 = vadd.f32 %v294, %v505
        %v507 = vpop.f32.mrb[0].mxu0
        %508 = vmatprep.mubr.bf16.mxu0 0
        %509 = vmatmul.mubr.bf16.gmra.mrb[0].mxu0 %v405
        %v510 = vpop.f32.mrb[0].mxu0
        %v511 = vadd.f32 %v294, %v510
        %v512 = vpop.f32.mrb[0].mxu0
        %v513 = vpop.f32.mrb[0].mxu0
        %v514 = vadd.f32 %v294, %v513
        %v515 = vpop.f32.mrb[0].mxu0
        %516 = vmatprep.mubr.bf16.mxu0 0
        %517 = vmatmul.mubr.bf16.gmra.mrb[0].mxu0 %v408
        %v518 = vpop.f32.mrb[0].mxu0
        %v519 = vadd.f32 %v294, %v518
        %v520 = vpop.f32.mrb[0].mxu0
        %v521 = vpop.f32.mrb[0].mxu0
        %v522 = vadd.f32 %v294, %v521
        %v523 = vpop.f32.mrb[0].mxu0
        %524 = vmatprep.mubr.bf16.mxu0 0
        %525 = vmatmul.mubr.bf16.gmra.mrb[0].mxu0 %v411
        %v526 = vpop.f32.mrb[0].mxu0
        %v527 = vadd.f32 %v294, %v526
        %v528 = vpop.f32.mrb[0].mxu0
        %v529 = vpop.f32.mrb[0].mxu0
        %v530 = vadd.f32 %v294, %v529
        %v531 = vpop.f32.mrb[0].mxu0
        %532 = vmatprep.mubr.bf16.mxu0 0
        %533 = vmatmul.mubr.bf16.gmra.mrb[0].mxu0 %v414
        %v534 = vpop.f32.mrb[0].mxu0
        %v535 = vadd.f32 %v294, %v534
        %v536 = vpop.f32.mrb[0].mxu0
        %v537 = vpop.f32.mrb[0].mxu0
        %v538 = vadd.f32 %v294, %v537
        %v539 = vpop.f32.mrb[0].mxu0
        %540 = vmatprep.mubr.bf16.mxu0 0
        %541 = vmatmul.mubr.bf16.gmra.mrb[0].mxu0 %v417
        %v542 = vpop.f32.mrb[0].mxu0
        %v543 = vadd.f32 %v294, %v542
        %v544 = vpop.f32.mrb[0].mxu0
        %v545 = vpop.f32.mrb[0].mxu0
        %v546 = vadd.f32 %v294, %v545
        %v547 = vpop.f32.mrb[0].mxu0
        %548 = vmatprep.mubr.bf16.mxu0 0
        %549 = vmatmul.mubr.bf16.gmra.mrb[0].mxu0 %v420
        %v550 = vpop.f32.mrb[0].mxu0
        %v551 = vadd.f32 %v294, %v550
        %v552 = vpop.f32.mrb[0].mxu0
        %v553 = vpop.f32.mrb[0].mxu0
        %v554 = vadd.f32 %v294, %v553
        %v555 = vpop.f32.mrb[0].mxu0
        %556 = vmatprep.mubr.bf16.mxu0 0
        %557 = vmatmul.mubr.bf16.gmra.mrb[0].mxu0 %v423
        %v558 = vpop.f32.mrb[0].mxu0
        %v559 = vadd.f32 %v294, %v558
        %v560 = vpop.f32.mrb[0].mxu0
        %v561 = vpop.f32.mrb[0].mxu0
        %v562 = vadd.f32 %v294, %v561
        %v563 = vpop.f32.mrb[0].mxu0
        %564 = vmatprep.mubr.bf16.mxu0 0
        %565 = vmatmul.mubr.bf16.gmra.mrb[0].mxu0 %v426
        %v566 = vpop.f32.mrb[0].mxu0
        %v567 = vadd.f32 %v294, %v566
        %v568 = vpop.f32.mrb[0].mxu0
        %v569 = vpop.f32.mrb[0].mxu0
        %v570 = vadd.f32 %v294, %v569
        %v571 = vpop.f32.mrb[0].mxu0
        %572 = vmatprep.mubr.bf16.mxu0 0
        %573 = vmatmul.mubr.bf16.gmra.mrb[0].mxu0 %v429
        %v574 = vpop.f32.mrb[0].mxu0
        %v575 = vadd.f32 %v294, %v574
        %v576 = vpop.f32.mrb[0].mxu0
        %v577 = vpop.f32.mrb[0].mxu0
        %v578 = vadd.f32 %v294, %v577
        %v579 = vpop.f32.mrb[0].mxu0
        %580 = vmatprep.mubr.bf16.mxu0 0
        %581 = vmatmul.mubr.bf16.gmra.mrb[0].mxu0 %v432
        %v582 = vpop.f32.mrb[0].mxu0
        %v583 = vadd.f32 %v294, %v582
        %v584 = vpop.f32.mrb[0].mxu0
        %v585 = vpop.f32.mrb[0].mxu0
        %v586 = vadd.f32 %v294, %v585
        %v587 = vpop.f32.mrb[0].mxu0
        %588 = vmatprep.mubr.bf16.mxu0 0
        %589 = vmatmul.mubr.bf16.gmra.mrb[0].mxu0 %v435
        %v590 = vpop.f32.mrb[0].mxu0
        %v591 = vadd.f32 %v294, %v590
        %v592 = vpop.f32.mrb[0].mxu0
        %v593 = vpop.f32.mrb[0].mxu0
        %v594 = vadd.f32 %v294, %v593
        %v595 = vpop.f32.mrb[0].mxu0
        %596 = vmatprep.mubr.bf16.mxu0 0
        %597 = vmatmul.mubr.bf16.gmra.mrb[0].mxu0 %v438
        %v598 = vpop.f32.mrb[0].mxu0
        %v599 = vadd.f32 %v294, %v598
        %v600 = vpop.f32.mrb[0].mxu0
        %v601 = vpop.f32.mrb[0].mxu0
        %v602 = vadd.f32 %v294, %v601
        %v603 = vpop.f32.mrb[0].mxu0
        %604 = vdwg.mxu0
        %v605 = vmax.f32 %v479, 0.0
        %v606 = vmax.f32 %v482, 0.0
        %v607 = vmax.f32 %v487, 0.0
        %v608 = vmax.f32 %v490, 0.0
        %v609 = vmax.f32 %v495, 0.0
        %v610 = vmax.f32 %v498, 0.0
        %v611 = vmax.f32 %v503, 0.0
        %v612 = vmax.f32 %v506, 0.0
        %v613 = vmax.f32 %v511, 0.0
        %v614 = vmax.f32 %v514, 0.0
        %v615 = vmax.f32 %v519, 0.0
        %v616 = vmax.f32 %v522, 0.0
        %v617 = vmax.f32 %v527, 0.0
        %v618 = vmax.f32 %v530, 0.0
        %v619 = vmax.f32 %v535, 0.0
        %v620 = vmax.f32 %v538, 0.0
        %v621 = vmax.f32 %v543, 0.0
        %v622 = vmax.f32 %v546, 0.0
        %v623 = vmax.f32 %v551, 0.0
        %v624 = vmax.f32 %v554, 0.0
        %v625 = vmax.f32 %v559, 0.0
        %v626 = vmax.f32 %v562, 0.0
        %v627 = vmax.f32 %v567, 0.0
        %v628 = vmax.f32 %v570, 0.0
        %v629 = vmax.f32 %v575, 0.0
        %v630 = vmax.f32 %v578, 0.0
        %v631 = vmax.f32 %v583, 0.0
        %v632 = vmax.f32 %v586, 0.0
        %v633 = vmax.f32 %v591, 0.0
        %v634 = vmax.f32 %v594, 0.0
        %v635 = vmax.f32 %v599, 0.0
        %v636 = vmax.f32 %v602, 0.0
        %v637 = vpack.c.bf16 %v606, %v605
        %v638 = vpack.c.bf16 %v608, %v607
        %v639 = vpack.c.bf16 %v610, %v609
        %v640 = vpack.c.bf16 %v612, %v611
        %v641 = vpack.c.bf16 %v614, %v613
        %v642 = vpack.c.bf16 %v616, %v615
        %v643 = vpack.c.bf16 %v618, %v617
        %v644 = vpack.c.bf16 %v620, %v619
        %v645 = vpack.c.bf16 %v622, %v621
        %v646 = vpack.c.bf16 %v624, %v623
        %v647 = vpack.c.bf16 %v626, %v625
        %v648 = vpack.c.bf16 %v628, %v627
        %v649 = vpack.c.bf16 %v630, %v629
        %v650 = vpack.c.bf16 %v632, %v631
        %v651 = vpack.c.bf16 %v634, %v633
        %v652 = vpack.c.bf16 %v636, %v635
        %v669 = vunpack.c.l.b16 %v637
        %v670 = vunpack.c.h.b16 %v637
        %v671 = vunpack.c.l.b16 %v638
        %v672 = vunpack.c.h.b16 %v638
        %v673 = vunpack.c.l.b16 %v639
        %v674 = vunpack.c.h.b16 %v639
        %v675 = vunpack.c.l.b16 %v640
        %v676 = vunpack.c.h.b16 %v640
        %v677 = vunpack.c.l.b16 %v641
        %v678 = vunpack.c.h.b16 %v641
        %v679 = vunpack.c.l.b16 %v642
        %v680 = vunpack.c.h.b16 %v642
        %v681 = vunpack.c.l.b16 %v643
        %v682 = vunpack.c.h.b16 %v643
        %v683 = vunpack.c.l.b16 %v644
        %v684 = vunpack.c.h.b16 %v644
        %v685 = vunpack.c.l.b16 %v645
        %v686 = vunpack.c.h.b16 %v645
        %v687 = vunpack.c.l.b16 %v646
        %v688 = vunpack.c.h.b16 %v646
        %v689 = vunpack.c.l.b16 %v647
        %v690 = vunpack.c.h.b16 %v647
        %v691 = vunpack.c.l.b16 %v648
        %v692 = vunpack.c.h.b16 %v648
        %v693 = vunpack.c.l.b16 %v649
        %v694 = vunpack.c.h.b16 %v649
        %v695 = vunpack.c.l.b16 %v650
        %v696 = vunpack.c.h.b16 %v650
        %v697 = vunpack.c.l.b16 %v651
        %v698 = vunpack.c.h.b16 %v651
        %v699 = vunpack.c.l.b16 %v652
        %v700 = vunpack.c.h.b16 %v652
        %v701 = vpack.c.b16 %v669, %v669
        %v702 = vpack.c.b16 %v670, %v670
        %v703 = vpack.c.b16 %v671, %v671
        %v704 = vpack.c.b16 %v672, %v672
        %v705 = vpack.c.b16 %v673, %v673
        %v706 = vpack.c.b16 %v674, %v674
        %v707 = vpack.c.b16 %v675, %v675
        %v708 = vpack.c.b16 %v676, %v676
        %v709 = vpack.c.b16 %v677, %v677
        %v710 = vpack.c.b16 %v678, %v678
        %v711 = vpack.c.b16 %v679, %v679
        %v712 = vpack.c.b16 %v680, %v680
        %v713 = vpack.c.b16 %v681, %v681
        %v714 = vpack.c.b16 %v682, %v682
        %v715 = vpack.c.b16 %v683, %v683
        %v716 = vpack.c.b16 %v684, %v684
        %v717 = vpack.c.b16 %v685, %v685
        %v718 = vpack.c.b16 %v686, %v686
        %v719 = vpack.c.b16 %v687, %v687
        %v720 = vpack.c.b16 %v688, %v688
        %v721 = vpack.c.b16 %v689, %v689
        %v722 = vpack.c.b16 %v690, %v690
        %v723 = vpack.c.b16 %v691, %v691
        %v724 = vpack.c.b16 %v692, %v692
        %v725 = vpack.c.b16 %v693, %v693
        %v726 = vpack.c.b16 %v694, %v694
        %v727 = vpack.c.b16 %v695, %v695
        %v728 = vpack.c.b16 %v696, %v696
        %v729 = vpack.c.b16 %v697, %v697
        %v730 = vpack.c.b16 %v698, %v698
        %v731 = vpack.c.b16 %v699, %v699
        %v732 = vpack.c.b16 %v700, %v700
        %765 = vst [vmem:[%s228] sm:$0xf] %v701
        %766 = vst [vmem:[%s228 + $0x4] sm:$0xf] %v702
        %767 = vst [vmem:[%s228 + $0x8] sm:$0xf] %v703
        %768 = vst [vmem:[%s228 + $0xc] sm:$0xf] %v704
        %769 = vst [vmem:[%s228 + $0x10] sm:$0xf] %v705
        %770 = vst [vmem:[%s228 + $0x14] sm:$0xf] %v706
        %771 = vst [vmem:[%s228 + $0x18] sm:$0xf] %v707
        %772 = vst [vmem:[%s228 + $0x1c] sm:$0xf] %v708
        %773 = vst [vmem:[%s228 + $0x20] sm:$0xf] %v709
        %774 = vst [vmem:[%s228 + $0x24] sm:$0xf] %v710
        %775 = vst [vmem:[%s228 + $0x28] sm:$0xf] %v711
        %776 = vst [vmem:[%s228 + $0x2c] sm:$0xf] %v712
        %777 = vst [vmem:[%s228 + $0x30] sm:$0xf] %v713
        %778 = vst [vmem:[%s228 + $0x34] sm:$0xf] %v714
        %779 = vst [vmem:[%s228 + $0x38] sm:$0xf] %v715
        %780 = vst [vmem:[%s228 + $0x3c] sm:$0xf] %v716
        %781 = vst [vmem:[%s228 + $0x40] sm:$0xf] %v717
        %782 = vst [vmem:[%s228 + $0x44] sm:$0xf] %v718
        %783 = vst [vmem:[%s228 + $0x48] sm:$0xf] %v719
        %784 = vst [vmem:[%s228 + $0x4c] sm:$0xf] %v720
        %785 = vst [vmem:[%s228 + $0x50] sm:$0xf] %v721
        %786 = vst [vmem:[%s228 + $0x54] sm:$0xf] %v722
        %787 = vst [vmem:[%s228 + $0x58] sm:$0xf] %v723
        %788 = vst [vmem:[%s228 + $0x5c] sm:$0xf] %v724
        %789 = vst [vmem:[%s228 + $0x60] sm:$0xf] %v725
        %790 = vst [vmem:[%s228 + $0x64] sm:$0xf] %v726
        %791 = vst [vmem:[%s228 + $0x68] sm:$0xf] %v727
        %792 = vst [vmem:[%s228 + $0x6c] sm:$0xf] %v728
        %793 = vst [vmem:[%s228 + $0x70] sm:$0xf] %v729
        %794 = vst [vmem:[%s228 + $0x74] sm:$0xf] %v730
        %795 = vst [vmem:[%s228 + $0x78] sm:$0xf] %v731
        %796 = vst [vmem:[%s228 + $0x7c] sm:$0xf] %v732
        %s797 = sand.u32 %s128, 1
        %s798 = scalar_lea.sflag [#allocation3], %s797
        %s799 = sand.u32 %s128, 1
        %s800 = smul.addr %s799, 128
        %s801 = scalar_lea.vmem [#allocation2], %s800
        // Predicated region
        $region33: #{tpu_custom_call.1} parent=31 // pred_check
          %p802 = pneg %p138
        $region34: #{tpu_custom_call.1} parent=31 // pred_check_branch
          %804 = sbr.rel (%p802) target = $region36
        $region35: #{tpu_custom_call.1} parent=31 // pred_region
          %s805 = smul.u32 32, %s22
          %s807 = ssub.s32 2048, 2048
          %808 = vsyncadd %s798, %s807
          %s809 = sadd.s32 %s23, %s805
          %s810 = smul.addr %s809, 64
          %s811 = scalar_lea.hbm %s3, %s810
          %s812 = sshll.u32 %s801, 4
          %s813 = int_to_ptr.vmem [resolvable:$true] %s812
          %818 = dma.vmem_to_hbm [thread:$0]  %s813, 2048, %s811, %s798, 64, 64, 4
        $region36: #{tpu_custom_call.1} parent=31 // pred_fallthru
          _
      $region32: #{tpu_custom_call.1} parent=5 // pred_fallthru
        _
      %p819 = scmp.le.s32.totalorder 2, %s12
      // Predicated region
      $region37: #{tpu_custom_call.1} parent=5 // pred_check
        %p820 = pneg %p819
      $region38: #{tpu_custom_call.1} parent=5 // pred_check_branch
        %822 = sbr.rel (%p820) target = $region40
      $region39: #{tpu_custom_call.1} parent=5 // pred_region
        %s823 = ssub.s32 %s12, 2
        // Predicated region
        $region41: #{tpu_custom_call.1} parent=39 // pred_check
          %p824 = pneg %p144
        $region42: #{tpu_custom_call.1} parent=39 // pred_check_branch
          %826 = sbr.rel (%p824) target = $region44
        $region43: #{tpu_custom_call.1} parent=39 // pred_region
          %s827 = sand.u32 %s129, 1
          %s828 = scalar_lea.sflag [#allocation3], %s827
          %s829 = sand.u32 %s129, 1
          %s830 = smul.addr %s829, 128
          %s831 = scalar_lea.vmem [#allocation2], %s830
          %832 = dma.done %s828, 2048
        $region44: #{tpu_custom_call.1} parent=39 // pred_fallthru
          _
      $region40: #{tpu_custom_call.1} parent=5 // pred_fallthru
        _
    $region6: #{tpu_custom_call.1} parent=1 // loop_footer
      %s16 = sadd.s32 1, %s12
    $region7: #{tpu_custom_call.1} parent=1 // loop_footer_branch
      %11 = sbr.rel target = $region3
    $region8: #{tpu_custom_call.1} parent=1 // loop_exit
      _
    %833 = vsyncpa [#allocation3], 1
    %s834 = scalar_lea.sflag [#allocation3], 1
    %835 = vsyncpa %s834, 1

</llo_original>
